<compile_context>
chip_gen: v7x
topology: tpu7x:2x2x1
jax: 0.10.0
libtpu: 0.0.40
codegen_flags: <defaults>
</compile_context>

<pallas_src>
import jax
import jax.numpy as jnp
from jax.experimental import pallas as pl
from jax.experimental.pallas import tpu as pltpu


def attn_kernel(full_ref, last_ref, w1_ref, w2_ref, b12_ref, v_ref, bv_ref,
                out_ref):
    # full_ref: (Bb, T, H)   last_ref: (Bb, 1, H)
    # w1_ref/w2_ref: (H, O)  b12_ref: (1, O)  v_ref: (1, 1, O)  bv_ref: (1, 1)
    # out_ref: (Bb, H)
    bb, T, H = full_ref.shape
    O = w1_ref.shape[1]

    full = full_ref[...]                       # (Bb, T, H), input dtype (MXU operand)
    last = last_ref[:, 0, :]                   # (Bb, H)

    # --- projections: one fused matmul over the whole batch block, f32 accum ---
    s2 = jnp.dot(full.reshape(bb * T, H), w2_ref[...],
                 preferred_element_type=jnp.float32).reshape(bb, T, O)
    s1 = jnp.dot(last, w1_ref[...],
                 preferred_element_type=jnp.float32) + b12_ref[...]        # (Bb, O)

    h = jnp.tanh(s1[:, None, :] + s2)                                       # (Bb, T, O) f32

    # --- score (V projection, N=1): keep off the MXU -> VPU mul + lane reduce ---
    score = jnp.sum(h * v_ref[...].astype(jnp.float32), axis=-1)            # (Bb, T)
    score = score + bv_ref[...]                                             # broadcast (1,1)

    # --- softmax over the sequence axis (PyTorch dim=1), f32 ---
    m = jnp.max(score, axis=-1, keepdims=True)
    e = jnp.exp(score - m)
    w = e / jnp.sum(e, axis=-1, keepdims=True)                              # (Bb, T)

    # --- context: (1, T) @ (T, H) per batch element on the MXU (lane-dense N=H) ---
    ctx = jnp.einsum("bqt,bth->bqh", w[:, None, :].astype(full.dtype), full,
                     preferred_element_type=jnp.float32)                    # (Bb, 1, H)
    out_ref[...] = ctx[:, 0, :].astype(out_ref.dtype)


def _round_up(x, m):
    return ((x + m - 1) // m) * m


def attn_forward(full, last, w1, b1, w2, b2, v, bv, *, b_blk=None):
    """full: (B, T, H), last: (B, 1, H). Weights pre-transposed to (in, out)."""
    B, T, H = full.shape
    O = w1.shape[1]
    assert w1.shape == (H, O) and w2.shape == (H, O)
    assert v.shape == (O, 1) and last.shape == (B, 1, H)

    itemsize = jnp.dtype(full.dtype).itemsize

    if b_blk is None:
        # Size the batch block against a ~8 MiB double-buffered `full` stream
        # budget (leaves plenty of headroom under v7x's 64 MiB VMEM).
        per_b = 2 * T * H * itemsize
        cap = max(8, (8 * 1024 * 1024) // max(per_b, 1))
        cap = (min(cap, 128) // 8) * 8
        # Prefer >= 2 grid steps when the batch allows it (v7x has 2 TensorCores).
        half = max(8, (_round_up(B, 16) // 2 // 8) * 8)
        b_blk = max(8, min(cap, half))
    b_blk = int(b_blk)

    # Pad the batch to a multiple of the block; padded rows are zeros
    # (finite everywhere: tanh/softmax of constants, zero context) and dropped.
    B_pad = _round_up(B, b_blk)
    if B_pad != B:
        full = jnp.pad(full, ((0, B_pad - B), (0, 0), (0, 0)))
        last = jnp.pad(last, ((0, B_pad - B), (0, 0), (0, 0)))

    # Pre-fold constant biases; lay V out as a lane row for the VPU reduce.
    b12 = (b1 + b2).reshape(1, O).astype(jnp.float32)
    v3 = v.reshape(1, 1, O)
    bv2 = bv.reshape(1, 1).astype(jnp.float32)

    grid = (B_pad // b_blk,)

    out = pl.pallas_call(
        attn_kernel,
        out_shape=jax.ShapeDtypeStruct((B_pad, H), full.dtype),
        grid_spec=pltpu.PrefetchScalarGridSpec(
            num_scalar_prefetch=0,
            grid=grid,
            in_specs=[
                pl.BlockSpec((b_blk, T, H), lambda b: (b, 0, 0)),   # full
                pl.BlockSpec((b_blk, 1, H), lambda b: (b, 0, 0)),   # last
                pl.BlockSpec((H, O), lambda b: (0, 0)),             # W1^T
                pl.BlockSpec((H, O), lambda b: (0, 0)),             # W2^T
                pl.BlockSpec((1, O), lambda b: (0, 0)),             # b1 + b2
                pl.BlockSpec((1, 1, O), lambda b: (0, 0, 0)),       # V (lane row)
                pl.BlockSpec((1, 1), lambda b: (0, 0)),             # bV
            ],
            out_specs=pl.BlockSpec((b_blk, H), lambda b: (b, 0)),   # lane-dense out
        ),
        compiler_params=pltpu.CompilerParams(
            dimension_semantics=("parallel",),
            vmem_limit_bytes=48 * 1024 * 1024,   # headroom under v7x's 64 MiB
        ),
    )(full, last, w1, w2, b12, v3, bv2)
    return out[:B]


def attn_reference(full, last, w1, b1, w2, b2, v, bv):
    """Pure-JAX reference mirroring the PyTorch forward."""
    s = jnp.tanh(last @ w1 + b1 + full @ w2 + b2) @ v + bv          # (B, T, 1)
    aw = jax.nn.softmax(s, axis=1)                                   # (B, T, 1)
    return jnp.sum(aw * full, axis=1)                                # (B, H)


if __name__ == "__main__":
    # in_shape == out_shape is required for the original module to be runnable
    # (V is Linear(in_shape, 1) applied to an out_shape-sized activation).
    B, T, H = 2, 8, 32
    O = H

    key = jax.random.PRNGKey(0)
    ks = jax.random.split(key, 8)
    full = jax.random.normal(ks[0], (B, T, H), dtype=jnp.float32)
    last = jax.random.normal(ks[1], (B, 1, H), dtype=jnp.float32)

    scale = 1.0 / jnp.sqrt(H)
    # Weights stored as (in, out)  (already transposed vs. PyTorch's (out, in)).
    w1 = (jax.random.uniform(ks[2], (H, O), jnp.float32) * 2 - 1) * scale
    b1 = (jax.random.uniform(ks[3], (O,), jnp.float32) * 2 - 1) * scale
    w2 = (jax.random.uniform(ks[4], (H, O), jnp.float32) * 2 - 1) * scale
    b2 = (jax.random.uniform(ks[5], (O,), jnp.float32) * 2 - 1) * scale
    v = (jax.random.uniform(ks[6], (O, 1), jnp.float32) * 2 - 1) * scale
    bv = (jax.random.uniform(ks[7], (1,), jnp.float32) * 2 - 1) * scale

    out = attn_forward(full, last, w1, b1, w2, b2, v, bv)
    out = jax.block_until_ready(out)

    ref = attn_reference(full, last, w1, b1, w2, b2, v, bv)
    assert out.shape == (B, H)
    assert jnp.allclose(out, ref, atol=1e-5, rtol=1e-5), "mismatch vs reference"

    print("KERNEL_OK")
</pallas_src>

<mosaic_0001>
module attributes {stable_mosaic.version = 11 : i64} {
  func.func @attn_kernel(%arg0: i32, %arg1: memref<8x8x32xf32, #tpu.memory_space<vmem>>, %arg2: memref<8x1x32xf32, #tpu.memory_space<vmem>>, %arg3: memref<32x32xf32, #tpu.memory_space<vmem>>, %arg4: memref<32x32xf32, #tpu.memory_space<vmem>>, %arg5: memref<1x32xf32, #tpu.memory_space<vmem>>, %arg6: memref<1x1x32xf32, #tpu.memory_space<vmem>>, %arg7: memref<1x1xf32, #tpu.memory_space<vmem>>, %arg8: memref<8x32xf32, #tpu.memory_space<vmem>>) attributes {dimension_semantics = [#tpu.dimension_semantics<parallel>], iteration_bounds = array<i64: 1>, scalar_prefetch = 0 : i64, scratch_operands = 0 : i64, tpu.core_type = #tpu.core_type<tc>, window_params = [{transform_indices = @transform_0, window_bounds = array<i64: 8, 8, 32>}, {transform_indices = @transform_1, window_bounds = array<i64: 8, 1, 32>}, {pipeline_mode = #tpu.pipeline_mode<synchronous>, transform_indices = @transform_2, window_bounds = array<i64: 32, 32>}, {pipeline_mode = #tpu.pipeline_mode<synchronous>, transform_indices = @transform_3, window_bounds = array<i64: 32, 32>}, {pipeline_mode = #tpu.pipeline_mode<synchronous>, transform_indices = @transform_4, window_bounds = array<i64: 1, 32>}, {pipeline_mode = #tpu.pipeline_mode<synchronous>, transform_indices = @transform_5, window_bounds = array<i64: 1, 1, 32>}, {pipeline_mode = #tpu.pipeline_mode<synchronous>, transform_indices = @transform_6, window_bounds = array<i64: 1, 1>}, {transform_indices = @transform_7, window_bounds = array<i64: 8, 32>}]} {
    %c0 = arith.constant 0 : index
    %c0_0 = arith.constant 0 : index
    %c0_1 = arith.constant 0 : index
    %0 = vector.load %arg1[%c0, %c0_0, %c0_1] : memref<8x8x32xf32, #tpu.memory_space<vmem>>, vector<8x8x32xf32>
    %c0_2 = arith.constant 0 : index
    %c0_3 = arith.constant 0 : index
    %c0_4 = arith.constant 0 : index
    %1 = vector.load %arg2[%c0_2, %c0_3, %c0_4] : memref<8x1x32xf32, #tpu.memory_space<vmem>>, vector<8x1x32xf32>
    %2 = vector.shape_cast %1 : vector<8x1x32xf32> to vector<8x32xf32>
    %3 = vector.shape_cast %0 : vector<8x8x32xf32> to vector<64x32xf32>
    %c0_5 = arith.constant 0 : index
    %c0_6 = arith.constant 0 : index
    %4 = vector.load %arg4[%c0_5, %c0_6] : memref<32x32xf32, #tpu.memory_space<vmem>>, vector<32x32xf32>
    %cst = arith.constant dense<0.000000e+00> : vector<64x32xf32>
    %5 = tpu.matmul %3, %4, %cst {dimension_numbers = #tpu.dot_dimension_numbers<[1], [0], [0], [1], [0, 0, 1, 1], [], []>} : vector<64x32xf32>, vector<32x32xf32>, vector<64x32xf32> -> vector<64x32xf32>
    %6 = vector.shape_cast %5 : vector<64x32xf32> to vector<8x8x32xf32>
    %c0_7 = arith.constant 0 : index
    %c0_8 = arith.constant 0 : index
    %7 = vector.load %arg3[%c0_7, %c0_8] : memref<32x32xf32, #tpu.memory_space<vmem>>, vector<32x32xf32>
    %cst_9 = arith.constant dense<0.000000e+00> : vector<8x32xf32>
    %8 = tpu.matmul %2, %7, %cst_9 {dimension_numbers = #tpu.dot_dimension_numbers<[1], [0], [0], [1], [0, 0, 1, 1], [], []>} : vector<8x32xf32>, vector<32x32xf32>, vector<8x32xf32> -> vector<8x32xf32>
    %c0_10 = arith.constant 0 : index
    %c0_11 = arith.constant 0 : index
    %9 = vector.load %arg5[%c0_10, %c0_11] : memref<1x32xf32, #tpu.memory_space<vmem>>, vector<1x32xf32>
    %10 = vector.broadcast %9 : vector<1x32xf32> to vector<8x32xf32>
    %11 = arith.addf %8, %10 : vector<8x32xf32>
    %12 = vector.shape_cast %11 : vector<8x32xf32> to vector<8x1x32xf32>
    %13 = vector.broadcast %12 : vector<8x1x32xf32> to vector<8x8x32xf32>
    %14 = arith.addf %13, %6 : vector<8x8x32xf32>
    %15 = math.tanh %14 : vector<8x8x32xf32>
    %c0_12 = arith.constant 0 : index
    %c0_13 = arith.constant 0 : index
    %c0_14 = arith.constant 0 : index
    %16 = vector.load %arg6[%c0_12, %c0_13, %c0_14] : memref<1x1x32xf32, #tpu.memory_space<vmem>>, vector<1x1x32xf32>
    %17 = vector.broadcast %16 : vector<1x1x32xf32> to vector<8x8x32xf32>
    %18 = arith.mulf %15, %17 : vector<8x8x32xf32>
    %cst_15 = arith.constant dense<0.000000e+00> : vector<8x8xf32>
    %19 = vector.multi_reduction <add>, %18, %cst_15 [2] : vector<8x8x32xf32> to vector<8x8xf32>
    %c0_16 = arith.constant 0 : index
    %c0_17 = arith.constant 0 : index
    %20 = vector.load %arg7[%c0_16, %c0_17] : memref<1x1xf32, #tpu.memory_space<vmem>>, vector<1x1xf32>
    %21 = vector.broadcast %20 : vector<1x1xf32> to vector<8x8xf32>
    %22 = arith.addf %19, %21 : vector<8x8xf32>
    %cst_18 = arith.constant dense<0xFF800000> : vector<8xf32>
    %23 = vector.multi_reduction <maximumf>, %22, %cst_18 [1] : vector<8x8xf32> to vector<8xf32>
    %24 = vector.shape_cast %23 : vector<8xf32> to vector<8x1xf32>
    %25 = vector.broadcast %24 : vector<8x1xf32> to vector<8x8xf32>
    %26 = arith.subf %22, %25 : vector<8x8xf32>
    %27 = math.exp %26 : vector<8x8xf32>
    %cst_19 = arith.constant dense<0.000000e+00> : vector<8xf32>
    %28 = vector.multi_reduction <add>, %27, %cst_19 [1] : vector<8x8xf32> to vector<8xf32>
    %29 = vector.shape_cast %28 : vector<8xf32> to vector<8x1xf32>
    %30 = vector.broadcast %29 : vector<8x1xf32> to vector<8x8xf32>
    %31 = arith.divf %27, %30 : vector<8x8xf32>
    %32 = vector.shape_cast %31 : vector<8x8xf32> to vector<8x1x8xf32>
    "tpu.trace_start"() <{level = 10 : i32, message = "bqt,bth->bqh"}> : () -> ()
    %cst_20 = arith.constant dense<0.000000e+00> : vector<8x1x32xf32>
    %33 = tpu.matmul %32, %0, %cst_20 {dimension_numbers = #tpu.dot_dimension_numbers<[2], [1], [1], [2], [0, 0, 0, 1, 1, 2], [0], [0]>} : vector<8x1x8xf32>, vector<8x8x32xf32>, vector<8x1x32xf32> -> vector<8x1x32xf32>
    "tpu.trace_stop"() : () -> ()
    %34 = vector.shape_cast %33 : vector<8x1x32xf32> to vector<8x32xf32>
    %c0_21 = arith.constant 0 : index
    %c0_22 = arith.constant 0 : index
    %35 = vector.load %arg8[%c0_21, %c0_22] : memref<8x32xf32, #tpu.memory_space<vmem>>, vector<8x32xf32>
    tpu.vector_store %arg8[%c0_21, %c0_22], %34 {strides = array<i32>} : memref<8x32xf32, #tpu.memory_space<vmem>>, vector<8x32xf32>,
    return
  }
  func.func @transform_0(%arg0: i32) -> (i32, i32, i32) {
    %c0_i32 = arith.constant 0 : i32
    %c0_i32_0 = arith.constant 0 : i32
    %c0_i32_1 = arith.constant 0 : i32
    return %arg0, %c0_i32, %c0_i32_0 : i32, i32, i32
  }
  func.func @transform_1(%arg0: i32) -> (i32, i32, i32) {
    %c0_i32 = arith.constant 0 : i32
    %c0_i32_0 = arith.constant 0 : i32
    %c0_i32_1 = arith.constant 0 : i32
    return %arg0, %c0_i32, %c0_i32_0 : i32, i32, i32
  }
  func.func @transform_2(%arg0: i32) -> (i32, i32) {
    %c0_i32 = arith.constant 0 : i32
    %c0_i32_0 = arith.constant 0 : i32
    %c0_i32_1 = arith.constant 0 : i32
    return %c0_i32, %c0_i32_0 : i32, i32
  }
  func.func @transform_3(%arg0: i32) -> (i32, i32) {
    %c0_i32 = arith.constant 0 : i32
    %c0_i32_0 = arith.constant 0 : i32
    %c0_i32_1 = arith.constant 0 : i32
    return %c0_i32, %c0_i32_0 : i32, i32
  }
  func.func @transform_4(%arg0: i32) -> (i32, i32) {
    %c0_i32 = arith.constant 0 : i32
    %c0_i32_0 = arith.constant 0 : i32
    %c0_i32_1 = arith.constant 0 : i32
    return %c0_i32, %c0_i32_0 : i32, i32
  }
  func.func @transform_5(%arg0: i32) -> (i32, i32, i32) {
    %c0_i32 = arith.constant 0 : i32
    %c0_i32_0 = arith.constant 0 : i32
    %c0_i32_1 = arith.constant 0 : i32
    %c0_i32_2 = arith.constant 0 : i32
    return %c0_i32, %c0_i32_0, %c0_i32_1 : i32, i32, i32
  }
  func.func @transform_6(%arg0: i32) -> (i32, i32) {
    %c0_i32 = arith.constant 0 : i32
    %c0_i32_0 = arith.constant 0 : i32
    %c0_i32_1 = arith.constant 0 : i32
    return %c0_i32, %c0_i32_0 : i32, i32
  }
  func.func @transform_7(%arg0: i32) -> (i32, i32) {
    %c0_i32 = arith.constant 0 : i32
    %c0_i32_0 = arith.constant 0 : i32
    return %arg0, %c0_i32 : i32, i32
  }
}

</mosaic_0001>

<llo_original>
// kernel: tpu_custom_call.1
$region0: #{tpu_custom_call.1}
  #allocation0 [shape = 'u32[]', space=smem, size = 0x4, offset = 0x4, fixed_abs, tag = 'smem constant byte address 0x4 - core index']
  #allocation1 [shape = 'u32[144,128]{1,0:T(1,128)}', space=vmem, size = 0x12000, scoped, tag = 'internal scratch']
  #allocation2 [shape = 'f32[1,1]{1,0:T(1,128)S(1)}', space=vmem, size = 0x200, scoped, tag = 'scoped memory for tpu_custom_call.1']
  %s0 = inlined_call_operand.hbm [shape: f32[8,8,32], index: 0, kind: input, shape index: {}]
  %s1 = inlined_call_operand.hbm [shape: f32[8,1,32], index: 1, kind: input, shape index: {}]
  %s2 = inlined_call_operand.hbm [shape: f32[32,32], index: 2, kind: input, shape index: {}]
  %s3 = inlined_call_operand.hbm [shape: f32[32,32], index: 3, kind: input, shape index: {}]
  %s4 = inlined_call_operand.vmem [shape: f32[1,32], index: 4, kind: input, shape index: {}]
  %s5 = inlined_call_operand.vmem [shape: f32[1,1,32], index: 5, kind: input, shape index: {}]
  %s6 = inlined_call_operand.<no memory space> [shape: f32[1,1], index: 6, kind: input, shape index: {}]
  %s7 = inlined_call_operand.hbm [shape: f32[8,32], index: 7, kind: output, shape index: {}]
  %s8 = sld [smem:[#allocation0]]
  $region54: #{tpu_custom_call.1} parent=0
    _
  %s10 = ssub.s32 1, %s8
  %s11 = scalar_select 0, %s10, %s8
  %v12 = vstv %s6
  %13 = vst [vmem:[#allocation2] sm:$0x1] %v12
  $region1: #{tpu_custom_call.1} parent=0
    #allocation3 [shape = 'u8[32768]{0}', space=vmem, size = 0x8000, scoped, tag = 'input window, operand 0, single buffered']
    #allocation4 [shape = 's32[1]{0}', space=sflag, size = 0x4, scoped, tag = 'scoped memory for tpu_custom_call.1']
    #allocation5 [shape = 's32[1]{0}', space=sflag, size = 0x4, scoped, tag = 'scoped memory for tpu_custom_call.1']
    #allocation6 [shape = 'u8[4096]{0}', space=vmem, size = 0x1000, scoped, tag = 'input window, operand 1, single buffered']
    #allocation7 [shape = 's32[1]{0}', space=sflag, size = 0x4, scoped, tag = 'scoped memory for tpu_custom_call.1']
    #allocation8 [shape = 'u8[16384]{0}', space=vmem, size = 0x4000, scoped, tag = 'input window, operand 2, single buffered']
    #allocation9 [shape = 'u8[16384]{0}', space=vmem, size = 0x4000, scoped, tag = 'input window, operand 3, single buffered']
    #allocation10 [shape = 's32[1]{0}', space=sflag, size = 0x4, scoped, tag = 'scoped memory for tpu_custom_call.1']
    #allocation11 [shape = 'u8[4096]{0}', space=vmem, size = 0x1000, scoped, tag = 'output window, operand 0, single buffered']
    %14 = vsyncpa [#allocation4], 0
    %15 = vsyncpa [#allocation7], 0
    %16 = vsyncpa [#allocation10], 0
    %17 = vsyncpa [#allocation5], 0
    // Predicated region
    $region2: #{tpu_custom_call.1} parent=1 // pred_check
      _
    $region3: #{tpu_custom_call.1} parent=1 // pred_check_branch
      %19 = sbr.rel (0) target = $region5
    $region4: #{tpu_custom_call.1} parent=1 // pred_region
      %s21 = ssub.s32 1024, 1024
      %22 = vsyncadd [#allocation4], %s21
      %s23 = sshll.u32 [#allocation3], 4
      %s24 = int_to_ptr.vmem [resolvable:$true] %s23
      %29 = dma.hbm_to_vmem [thread:$0]  %s0, 1024, %s24, [#allocation4], 128, 128, 8
    $region5: #{tpu_custom_call.1} parent=1 // pred_fallthru
      _
    // Predicated region
    $region6: #{tpu_custom_call.1} parent=1 // pred_check
      _
    $region7: #{tpu_custom_call.1} parent=1 // pred_check_branch
      %31 = sbr.rel (0) target = $region9
    $region8: #{tpu_custom_call.1} parent=1 // pred_region
      %s33 = ssub.s32 128, 128
      %34 = vsyncadd [#allocation7], %s33
      %s35 = sshll.u32 [#allocation6], 4
      %s36 = int_to_ptr.vmem [resolvable:$true] %s35
      %41 = dma.hbm_to_vmem [thread:$0]  %s1, 128, %s36, [#allocation7], 16, 16, 1
    $region9: #{tpu_custom_call.1} parent=1 // pred_fallthru
      _
    // Predicated region
    $region10: #{tpu_custom_call.1} parent=1 // pred_check
      _
    $region11: #{tpu_custom_call.1} parent=1 // pred_check_branch
      %43 = sbr.rel (0) target = $region13
    $region12: #{tpu_custom_call.1} parent=1 // pred_region
      %s45 = ssub.s32 512, 512
      %46 = vsyncadd [#allocation7], %s45
      %s47 = sshll.u32 [#allocation8], 4
      %s48 = int_to_ptr.vmem [resolvable:$true] %s47
      %53 = dma.hbm_to_vmem [thread:$0]  %s2, 512, %s48, [#allocation7], 128, 128, 8
    $region13: #{tpu_custom_call.1} parent=1 // pred_fallthru
      _
    // Predicated region
    $region14: #{tpu_custom_call.1} parent=1 // pred_check
      _
    $region15: #{tpu_custom_call.1} parent=1 // pred_check_branch
      %55 = sbr.rel (0) target = $region17
    $region16: #{tpu_custom_call.1} parent=1 // pred_region
      %s57 = ssub.s32 512, 512
      %58 = vsyncadd [#allocation10], %s57
      %s59 = sshll.u32 [#allocation9], 4
      %s60 = int_to_ptr.vmem [resolvable:$true] %s59
      %65 = dma.hbm_to_vmem [thread:$0]  %s3, 512, %s60, [#allocation10], 128, 128, 8
    $region17: #{tpu_custom_call.1} parent=1 // pred_fallthru
      _
    // Predicated region
    $region18: #{tpu_custom_call.1} parent=1 // pred_check
      _
    $region19: #{tpu_custom_call.1} parent=1 // pred_check_branch
      %67 = sbr.rel (0) target = $region21
    $region20: #{tpu_custom_call.1} parent=1 // pred_region
      _
    $region21: #{tpu_custom_call.1} parent=1 // pred_fallthru
      _
    // Predicated region
    $region22: #{tpu_custom_call.1} parent=1 // pred_check
      _
    $region23: #{tpu_custom_call.1} parent=1 // pred_check_branch
      %69 = sbr.rel (0) target = $region25
    $region24: #{tpu_custom_call.1} parent=1 // pred_region
      _
    $region25: #{tpu_custom_call.1} parent=1 // pred_fallthru
      _
    // Predicated region
    $region26: #{tpu_custom_call.1} parent=1 // pred_check
      _
    $region27: #{tpu_custom_call.1} parent=1 // pred_check_branch
      %71 = sbr.rel (0) target = $region29
    $region28: #{tpu_custom_call.1} parent=1 // pred_region
      _
    $region29: #{tpu_custom_call.1} parent=1 // pred_fallthru
      _
    // Predicated region
    $region30: #{tpu_custom_call.1} parent=1 // pred_check
      _
    $region31: #{tpu_custom_call.1} parent=1 // pred_check_branch
      %73 = sbr.rel (0) target = $region33
    $region32: #{tpu_custom_call.1} parent=1 // pred_region
      %74 = dma.done [#allocation4], 1024
    $region33: #{tpu_custom_call.1} parent=1 // pred_fallthru
      _
    // Predicated region
    $region34: #{tpu_custom_call.1} parent=1 // pred_check
      _
    $region35: #{tpu_custom_call.1} parent=1 // pred_check_branch
      %76 = sbr.rel (0) target = $region37
    $region36: #{tpu_custom_call.1} parent=1 // pred_region
      %77 = dma.done [#allocation7], 128
    $region37: #{tpu_custom_call.1} parent=1 // pred_fallthru
      _
    // Predicated region
    $region38: #{tpu_custom_call.1} parent=1 // pred_check
      _
    $region39: #{tpu_custom_call.1} parent=1 // pred_check_branch
      %79 = sbr.rel (0) target = $region41
    $region40: #{tpu_custom_call.1} parent=1 // pred_region
      %80 = dma.done [#allocation7], 512
    $region41: #{tpu_custom_call.1} parent=1 // pred_fallthru
      _
    // Predicated region
    $region42: #{tpu_custom_call.1} parent=1 // pred_check
      _
    $region43: #{tpu_custom_call.1} parent=1 // pred_check_branch
      %82 = sbr.rel (0) target = $region45
    $region44: #{tpu_custom_call.1} parent=1 // pred_region
      %83 = dma.done [#allocation10], 512
    $region45: #{tpu_custom_call.1} parent=1 // pred_fallthru
      _
    %v84 = vld [vmem:[#allocation3] sm:$0xff]
    %v85 = vld [vmem:[#allocation3 + $0x8] sm:$0xff]
    %v86 = vld [vmem:[#allocation3 + $0x10] sm:$0xff]
    %v87 = vld [vmem:[#allocation3 + $0x18] sm:$0xff]
    %v88 = vld [vmem:[#allocation3 + $0x20] sm:$0xff]
    %v89 = vld [vmem:[#allocation3 + $0x28] sm:$0xff]
    %v90 = vld [vmem:[#allocation3 + $0x30] sm:$0xff]
    %v91 = vld [vmem:[#allocation3 + $0x38] sm:$0xff]
    %v92 = vld [vmem:[#allocation6] sm:$0x1]
    %v93 = vld [vmem:[#allocation6 + $0x1] sm:$0x1]
    %v94 = vld [vmem:[#allocation6 + $0x2] sm:$0x1]
    %v95 = vld [vmem:[#allocation6 + $0x3] sm:$0x1]
    %v96 = vld [vmem:[#allocation6 + $0x4] sm:$0x1]
    %v97 = vld [vmem:[#allocation6 + $0x5] sm:$0x1]
    %v98 = vld [vmem:[#allocation6 + $0x6] sm:$0x1]
    %v99 = vld [vmem:[#allocation6 + $0x7] sm:$0x1]
    %v100 = vld [vmem:[#allocation9] sm:$0xff]
    %v101 = vld [vmem:[#allocation9 + $0x8] sm:$0xff]
    %v102 = vld [vmem:[#allocation9 + $0x10] sm:$0xff]
    %v103 = vld [vmem:[#allocation9 + $0x18] sm:$0xff]
    %vm104 = vcmask 261120
    %v106 = vsel %vm104, %v84, 0
    %v109 = vsel %vm104, %v85, 0
    %v112 = vsel %vm104, %v86, 0
    %v115 = vsel %vm104, %v87, 0
    %v118 = vsel %vm104, %v88, 0
    %v121 = vsel %vm104, %v89, 0
    %v124 = vsel %vm104, %v90, 0
    %v127 = vsel %vm104, %v91, 0
    %129 = vmatprep.subr.mxu0 0.0
    %130 = vmatpush1.msra.mxu0 %v100
    %131 = vmatprep.subr.mxu0 0.0
    %132 = vmatpush1.msra.mxu0 %v101
    %133 = vmatprep.subr.mxu0 0.0
    %134 = vmatpush1.msra.mxu0 %v102
    %135 = vmatprep.subr.mxu0 0.0
    %136 = vmatpush1.msra.mxu0 %v103
    %137 = vmatprep.subr.mxu0 0.0
    %138 = vmatpush1.msra.mxu0 0.0
    %139 = vmatprep.subr.mxu0 0.0
    %140 = vmatpush1.msra.mxu0 0.0
    %141 = vmatprep.subr.mxu0 0.0
    %142 = vmatpush1.msra.mxu0 0.0
    %143 = vmatprep.subr.mxu0 0.0
    %144 = vmatpush1.msra.mxu0 0.0
    %145 = vmatprep.subr.mxu0 0.0
    %146 = vmatpush1.msra.mxu0 0.0
    %147 = vmatprep.subr.mxu0 0.0
    %148 = vmatpush1.msra.mxu0 0.0
    %149 = vmatprep.subr.mxu0 0.0
    %150 = vmatpush1.msra.mxu0 0.0
    %151 = vmatprep.subr.mxu0 0.0
    %152 = vmatpush1.msra.mxu0 0.0
    %153 = vmatprep.subr.mxu0 0.0
    %154 = vmatpush1.msra.mxu0 0.0
    %155 = vmatprep.subr.mxu0 0.0
    %156 = vmatpush1.msra.mxu0 0.0
    %157 = vmatprep.subr.mxu0 0.0
    %158 = vmatpush1.msra.mxu0 0.0
    %159 = vmatprep.subr.mxu0 0.0
    %160 = vmatpush1.msra.mxu0 0.0
    %161 = vmatprep.subr.mxu0 0.0
    %162 = vmatpush1.msra.mxu0 0.0
    %163 = vmatprep.subr.mxu0 0.0
    %164 = vmatpush1.msra.mxu0 0.0
    %165 = vmatprep.subr.mxu0 0.0
    %166 = vmatpush1.msra.mxu0 0.0
    %167 = vmatprep.subr.mxu0 0.0
    %168 = vmatpush1.msra.mxu0 0.0
    %169 = vmatprep.subr.mxu0 0.0
    %170 = vmatpush1.msra.mxu0 0.0
    %171 = vmatprep.subr.mxu0 0.0
    %172 = vmatpush1.msra.mxu0 0.0
    %173 = vmatprep.subr.mxu0 0.0
    %174 = vmatpush1.msra.mxu0 0.0
    %175 = vmatprep.subr.mxu0 0.0
    %176 = vmatpush1.msra.mxu0 0.0
    %177 = vmatprep.subr.mxu0 0.0
    %178 = vmatpush1.msra.mxu0 0.0
    %179 = vmatprep.subr.mxu0 0.0
    %180 = vmatpush1.msra.mxu0 0.0
    %181 = vmatprep.subr.mxu0 0.0
    %182 = vmatpush1.msra.mxu0 0.0
    %183 = vmatprep.subr.mxu0 0.0
    %184 = vmatpush1.msra.mxu0 0.0
    %185 = vmatprep.subr.mxu0 0.0
    %186 = vmatpush1.msra.mxu0 0.0
    %187 = vmatprep.subr.mxu0 0.0
    %188 = vmatpush1.msra.mxu0 0.0
    %189 = vmatprep.subr.mxu0 0.0
    %190 = vmatpush1.msra.mxu0 0.0
    %191 = vmatprep.subr.mxu0 0.0
    %192 = vmatpush1.msra.mxu0 0.0
    %193 = vmatprep.mubr.f32.mxu0 0.0
    %194 = vmatmul.mubr.f32.gmra.mrb[0].mxu0 %v106
    %v195 = vpop.f32.mrb[0].mxu0
    %v196 = vadd.f32 0.0, %v195
    %v197 = vpop.f32.mrb[0].mxu0
    %198 = vmatprep.mubr.f32.mxu0 0.0
    %199 = vmatmul.mubr.f32.gmra.mrb[0].mxu0 %v109
    %v200 = vpop.f32.mrb[0].mxu0
    %v201 = vadd.f32 0.0, %v200
    %v202 = vpop.f32.mrb[0].mxu0
    %203 = vmatprep.mubr.f32.mxu0 0.0
    %204 = vmatmul.mubr.f32.gmra.mrb[0].mxu0 %v112
    %v205 = vpop.f32.mrb[0].mxu0
    %v206 = vadd.f32 0.0, %v205
    %v207 = vpop.f32.mrb[0].mxu0
    %208 = vmatprep.mubr.f32.mxu0 0.0
    %209 = vmatmul.mubr.f32.gmra.mrb[0].mxu0 %v115
    %v210 = vpop.f32.mrb[0].mxu0
    %v211 = vadd.f32 0.0, %v210
    %v212 = vpop.f32.mrb[0].mxu0
    %213 = vmatprep.mubr.f32.mxu0 0.0
    %214 = vmatmul.mubr.f32.gmra.mrb[0].mxu0 %v118
    %v215 = vpop.f32.mrb[0].mxu0
    %v216 = vadd.f32 0.0, %v215
    %v217 = vpop.f32.mrb[0].mxu0
    %218 = vmatprep.mubr.f32.mxu0 0.0
    %219 = vmatmul.mubr.f32.gmra.mrb[0].mxu0 %v121
    %v220 = vpop.f32.mrb[0].mxu0
    %v221 = vadd.f32 0.0, %v220
    %v222 = vpop.f32.mrb[0].mxu0
    %223 = vmatprep.mubr.f32.mxu0 0.0
    %224 = vmatmul.mubr.f32.gmra.mrb[0].mxu0 %v124
    %v225 = vpop.f32.mrb[0].mxu0
    %v226 = vadd.f32 0.0, %v225
    %v227 = vpop.f32.mrb[0].mxu0
    %228 = vmatprep.mubr.f32.mxu0 0.0
    %229 = vmatmul.mubr.f32.gmra.mrb[0].mxu0 %v127
    %v230 = vpop.f32.mrb[0].mxu0
    %v231 = vadd.f32 0.0, %v230
    %v232 = vpop.f32.mrb[0].mxu0
    %233 = vdwg.mxu0
    %v234 = vld [vmem:[#allocation8] sm:$0xff]
    %v235 = vld [vmem:[#allocation8 + $0x8] sm:$0xff]
    %v236 = vld [vmem:[#allocation8 + $0x10] sm:$0xff]
    %v237 = vld [vmem:[#allocation8 + $0x18] sm:$0xff]
    %v238 = vld [vmem:[%s4] sm:$0x1]
    %v240 = vlaneseq
    %v241 = vshrl.u32 %v240, 7
    %v242 = vsub.s32 0, %v241
    %v243 = vrot.slane %v238, %v242
    %v253 = vcombine.low %v92, %v93
    %v254 = vcombine.low %v94, %v95
    %v255 = vcombine.low %v96, %v97
    %v256 = vcombine.low %v98, %v99
    %v258 = vunpack.c.l.s4 1966171168
    %v259 = vunpack.c.0.s8 %v258
    %v260 = vlaneseq
    %v261 = vshrl.u32 %v260, 7
    %v262 = vsub.s32 %v259, %v261
    %v263 = vrot.slane %v253, %v262
    %v265 = vunpack.c.l.s4 1966171168
    %v266 = vunpack.c.0.s8 %v265
    %v267 = vlaneseq
    %v268 = vshrl.u32 %v267, 7
    %v269 = vsub.s32 %v266, %v268
    %v270 = vrot.slane %v254, %v269
    %v272 = vunpack.c.l.s4 1966171168
    %v273 = vunpack.c.0.s8 %v272
    %v274 = vlaneseq
    %v275 = vshrl.u32 %v274, 7
    %v276 = vsub.s32 %v273, %v275
    %v277 = vrot.slane %v255, %v276
    %v279 = vunpack.c.l.s4 1966171168
    %v280 = vunpack.c.0.s8 %v279
    %v281 = vlaneseq
    %v282 = vshrl.u32 %v281, 7
    %v283 = vsub.s32 %v280, %v282
    %v284 = vrot.slane %v256, %v283
    %v285 = vcombine.low %v263, %v270
    %v286 = vcombine.low %v277, %v284
    %v288 = vunpack.c.l.s4 1966171168
    %v289 = vunpack.c.0.s8 %v288
    %v290 = vlaneseq
    %v291 = vshrl.u32 %v290, 7
    %v292 = vsub.s32 %v289, %v291
    %v293 = vrot.slane %v285, %v292
    %v295 = vunpack.c.l.s4 1966171168
    %v296 = vunpack.c.0.s8 %v295
    %v297 = vlaneseq
    %v298 = vshrl.u32 %v297, 7
    %v299 = vsub.s32 %v296, %v298
    %v300 = vrot.slane %v286, %v299
    %v301 = vcombine.low %v293, %v300
    %v302 = vsel %vm104, %v301, 0
    %304 = vmatprep.subr.mxu0 0.0
    %305 = vmatpush1.msra.mxu0 %v234
    %306 = vmatprep.subr.mxu0 0.0
    %307 = vmatpush1.msra.mxu0 %v235
    %308 = vmatprep.subr.mxu0 0.0
    %309 = vmatpush1.msra.mxu0 %v236
    %310 = vmatprep.subr.mxu0 0.0
    %311 = vmatpush1.msra.mxu0 %v237
    %312 = vmatprep.subr.mxu0 0.0
    %313 = vmatpush1.msra.mxu0 0.0
    %314 = vmatprep.subr.mxu0 0.0
    %315 = vmatpush1.msra.mxu0 0.0
    %316 = vmatprep.subr.mxu0 0.0
    %317 = vmatpush1.msra.mxu0 0.0
    %318 = vmatprep.subr.mxu0 0.0
    %319 = vmatpush1.msra.mxu0 0.0
    %320 = vmatprep.subr.mxu0 0.0
    %321 = vmatpush1.msra.mxu0 0.0
    %322 = vmatprep.subr.mxu0 0.0
    %323 = vmatpush1.msra.mxu0 0.0
    %324 = vmatprep.subr.mxu0 0.0
    %325 = vmatpush1.msra.mxu0 0.0
    %326 = vmatprep.subr.mxu0 0.0
    %327 = vmatpush1.msra.mxu0 0.0
    %328 = vmatprep.subr.mxu0 0.0
    %329 = vmatpush1.msra.mxu0 0.0
    %330 = vmatprep.subr.mxu0 0.0
    %331 = vmatpush1.msra.mxu0 0.0
    %332 = vmatprep.subr.mxu0 0.0
    %333 = vmatpush1.msra.mxu0 0.0
    %334 = vmatprep.subr.mxu0 0.0
    %335 = vmatpush1.msra.mxu0 0.0
    %336 = vmatprep.subr.mxu0 0.0
    %337 = vmatpush1.msra.mxu0 0.0
    %338 = vmatprep.subr.mxu0 0.0
    %339 = vmatpush1.msra.mxu0 0.0
    %340 = vmatprep.subr.mxu0 0.0
    %341 = vmatpush1.msra.mxu0 0.0
    %342 = vmatprep.subr.mxu0 0.0
    %343 = vmatpush1.msra.mxu0 0.0
    %344 = vmatprep.subr.mxu0 0.0
    %345 = vmatpush1.msra.mxu0 0.0
    %346 = vmatprep.subr.mxu0 0.0
    %347 = vmatpush1.msra.mxu0 0.0
    %348 = vmatprep.subr.mxu0 0.0
    %349 = vmatpush1.msra.mxu0 0.0
    %350 = vmatprep.subr.mxu0 0.0
    %351 = vmatpush1.msra.mxu0 0.0
    %352 = vmatprep.subr.mxu0 0.0
    %353 = vmatpush1.msra.mxu0 0.0
    %354 = vmatprep.subr.mxu0 0.0
    %355 = vmatpush1.msra.mxu0 0.0
    %356 = vmatprep.subr.mxu0 0.0
    %357 = vmatpush1.msra.mxu0 0.0
    %358 = vmatprep.subr.mxu0 0.0
    %359 = vmatpush1.msra.mxu0 0.0
    %360 = vmatprep.subr.mxu0 0.0
    %361 = vmatpush1.msra.mxu0 0.0
    %362 = vmatprep.subr.mxu0 0.0
    %363 = vmatpush1.msra.mxu0 0.0
    %364 = vmatprep.subr.mxu0 0.0
    %365 = vmatpush1.msra.mxu0 0.0
    %366 = vmatprep.subr.mxu0 0.0
    %367 = vmatpush1.msra.mxu0 0.0
    %368 = vmatprep.mubr.f32.mxu0 0.0
    %369 = vmatmul.mubr.f32.gmra.mrb[0].mxu0 %v302
    %v370 = vpop.f32.mrb[0].mxu0
    %v371 = vadd.f32 %v243, %v370
    %v372 = vpop.f32.mrb[0].mxu0
    %373 = vdwg.mxu0
    %v375 = vcombine.high %v371, %v371
    %v377 = vunpack.c.l.s4 1966171168
    %v378 = vunpack.c.0.s8 %v377
    %v379 = vlaneseq
    %v380 = vshrl.u32 %v379, 7
    %v381 = vsub.s32 %v378, %v380
    %v382 = vrot.slane %v371, %v381
    %v384 = vunpack.c.l.s4 1966171168
    %v385 = vunpack.c.0.s8 %v384
    %v386 = vlaneseq
    %v387 = vshrl.u32 %v386, 7
    %v388 = vsub.s32 %v385, %v387
    %v389 = vrot.slane %v375, %v388
    %v390 = vcombine.high %v382, %v382
    %v391 = vcombine.high %v389, %v389
    %v393 = vunpack.c.l.s4 1966171168
    %v394 = vunpack.c.0.s8 %v393
    %v395 = vlaneseq
    %v396 = vshrl.u32 %v395, 7
    %v397 = vsub.s32 %v394, %v396
    %v398 = vrot.slane %v382, %v397
    %v400 = vunpack.c.l.s4 1966171168
    %v401 = vunpack.c.0.s8 %v400
    %v402 = vlaneseq
    %v403 = vshrl.u32 %v402, 7
    %v404 = vsub.s32 %v401, %v403
    %v405 = vrot.slane %v389, %v404
    %v407 = vunpack.c.l.s4 1966171168
    %v408 = vunpack.c.0.s8 %v407
    %v409 = vlaneseq
    %v410 = vshrl.u32 %v409, 7
    %v411 = vsub.s32 %v408, %v410
    %v412 = vrot.slane %v390, %v411
    %v414 = vunpack.c.l.s4 1966171168
    %v415 = vunpack.c.0.s8 %v414
    %v416 = vlaneseq
    %v417 = vshrl.u32 %v416, 7
    %v418 = vsub.s32 %v415, %v417
    %v419 = vrot.slane %v391, %v418
    %v420 = vcombine.high %v398, %v398
    %v421 = vcombine.high %v405, %v405
    %v422 = vcombine.high %v412, %v412
    %v423 = vcombine.high %v419, %v419
    %v424 = vlaneseq
    %v425 = vshrl.u32 %v424, 7
    %v426 = vsub.s32 0, %v425
    %v427 = vrot.slane %v398, %v426
    %v428 = vlaneseq
    %v429 = vshrl.u32 %v428, 7
    %v430 = vsub.s32 0, %v429
    %v431 = vrot.slane %v412, %v430
    %v432 = vlaneseq
    %v433 = vshrl.u32 %v432, 7
    %v434 = vsub.s32 0, %v433
    %v435 = vrot.slane %v420, %v434
    %v436 = vlaneseq
    %v437 = vshrl.u32 %v436, 7
    %v438 = vsub.s32 0, %v437
    %v439 = vrot.slane %v422, %v438
    %v440 = vlaneseq
    %v441 = vshrl.u32 %v440, 7
    %v442 = vsub.s32 0, %v441
    %v443 = vrot.slane %v405, %v442
    %v444 = vlaneseq
    %v445 = vshrl.u32 %v444, 7
    %v446 = vsub.s32 0, %v445
    %v447 = vrot.slane %v419, %v446
    %v448 = vlaneseq
    %v449 = vshrl.u32 %v448, 7
    %v450 = vsub.s32 0, %v449
    %v451 = vrot.slane %v421, %v450
    %v452 = vlaneseq
    %v453 = vshrl.u32 %v452, 7
    %v454 = vsub.s32 0, %v453
    %v455 = vrot.slane %v423, %v454
    %v464 = vadd.f32 %v427, %v196
    %v465 = vadd.f32 %v431, %v201
    %v466 = vadd.f32 %v435, %v206
    %v467 = vadd.f32 %v439, %v211
    %v468 = vadd.f32 %v443, %v216
    %v469 = vadd.f32 %v447, %v221
    %v470 = vadd.f32 %v451, %v226
    %v471 = vadd.f32 %v455, %v231
    %v472 = vtanh.pop %v464
    %v473 = vtanh.pop %v465
    %v474 = vtanh.pop %v466
    %v475 = vtanh.pop %v467
    %v476 = vtanh.pop %v468
    %v477 = vtanh.pop %v469
    %v478 = vtanh.pop %v470
    %v479 = vtanh.pop %v471
    %v480 = vld [vmem:[%s5] sm:$0x1]
    %v482 = vlaneseq
    %v483 = vshrl.u32 %v482, 7
    %v484 = vsub.s32 0, %v483
    %v485 = vrot.slane %v480, %v484
    %v487 = vmul.f32 %v472, %v485
    %v488 = vmul.f32 %v473, %v485
    %v489 = vmul.f32 %v474, %v485
    %v490 = vmul.f32 %v475, %v485
    %v491 = vmul.f32 %v476, %v485
    %v492 = vmul.f32 %v477, %v485
    %v493 = vmul.f32 %v478, %v485
    %v494 = vmul.f32 %v479, %v485
    %v495 = vsel %vm104, %v487, 0.0
    %496 = vadd.xlane.f32.xlu0 %v495
    %v497 = vpop.xlane.xlu0 %496
    %v498 = vsel %vm104, %v488, 0.0
    %499 = vadd.xlane.f32.xlu0 %v498
    %v500 = vpop.xlane.xlu0 %499
    %v501 = vsel %vm104, %v489, 0.0
    %502 = vadd.xlane.f32.xlu0 %v501
    %v503 = vpop.xlane.xlu0 %502
    %v504 = vsel %vm104, %v490, 0.0
    %505 = vadd.xlane.f32.xlu0 %v504
    %v506 = vpop.xlane.xlu0 %505
    %v507 = vsel %vm104, %v491, 0.0
    %508 = vadd.xlane.f32.xlu0 %v507
    %v509 = vpop.xlane.xlu0 %508
    %v510 = vsel %vm104, %v492, 0.0
    %511 = vadd.xlane.f32.xlu0 %v510
    %v512 = vpop.xlane.xlu0 %511
    %v513 = vsel %vm104, %v493, 0.0
    %514 = vadd.xlane.f32.xlu0 %v513
    %v515 = vpop.xlane.xlu0 %514
    %v516 = vsel %vm104, %v494, 0.0
    %517 = vadd.xlane.f32.xlu0 %v516
    %v518 = vpop.xlane.xlu0 %517
    %v519 = vld [vmem:[#allocation2] sm:$0x1]
    %v521 = vlaneseq
    %v522 = vshrl.u32 %v521, 7
    %v523 = vsub.s32 0, %v522
    %v524 = vrot.slane %v519, %v523
    %525 = vset.pattern.permute.xlu0 0
    %526 = vperm.xlu0 %525, %v524
    %v527 = vpop.permute.xlu0 %526
    %v529 = vadd.f32 %v497, %v527
    %v530 = vadd.f32 %v500, %v527
    %v531 = vadd.f32 %v503, %v527
    %v532 = vadd.f32 %v506, %v527
    %v533 = vadd.f32 %v509, %v527
    %v534 = vadd.f32 %v512, %v527
    %v535 = vadd.f32 %v515, %v527
    %v536 = vadd.f32 %v518, %v527
    %v545 = vlaneseq
    %v546 = vand.u32 %v545, 127
    %v547 = vlaneseq
    %v548 = vshrl.u32 %v547, 7
    %v549 = vsub.s32 %v546, %v548
    %v550 = vrot.slane %v529, %v549
    %v551 = vlaneseq
    %v552 = vshrl.u32 %v551, 7
    %v553 = vsub.s32 %v546, %v552
    %v554 = vrot.slane %v530, %v553
    %v555 = vlaneseq
    %v556 = vshrl.u32 %v555, 7
    %v557 = vsub.s32 %v546, %v556
    %v558 = vrot.slane %v531, %v557
    %v559 = vlaneseq
    %v560 = vshrl.u32 %v559, 7
    %v561 = vsub.s32 %v546, %v560
    %v562 = vrot.slane %v532, %v561
    %v563 = vlaneseq
    %v564 = vshrl.u32 %v563, 7
    %v565 = vsub.s32 %v546, %v564
    %v566 = vrot.slane %v533, %v565
    %v567 = vlaneseq
    %v568 = vshrl.u32 %v567, 7
    %v569 = vsub.s32 %v546, %v568
    %v570 = vrot.slane %v534, %v569
    %v571 = vlaneseq
    %v572 = vshrl.u32 %v571, 7
    %v573 = vsub.s32 %v546, %v572
    %v574 = vrot.slane %v535, %v573
    %v575 = vlaneseq
    %v576 = vshrl.u32 %v575, 7
    %v577 = vsub.s32 %v546, %v576
    %v578 = vrot.slane %v536, %v577
    %vm579 = vcmask 1041409
    %v580 = vsel %vm579, %v554, %v550
    %vm581 = vcmask 1042434
    %v582 = vsel %vm581, %v558, %v580
    %vm583 = vcmask 1043459
    %v584 = vsel %vm583, %v562, %v582
    %vm585 = vcmask 1044484
    %v586 = vsel %vm585, %v566, %v584
    %vm587 = vcmask 1045509
    %v588 = vsel %vm587, %v570, %v586
    %vm589 = vcmask 1046534
    %v590 = vsel %vm589, %v574, %v588
    %vm591 = vcmask 1047559
    %v592 = vsel %vm591, %v578, %v590
    %vm594 = vcmask 64512
    %v595 = vsel %vm594, %v592, -inf
    %596 = vmax.xlane.f32.xlu0 %v595
    %v597 = vpop.xlane.xlu0 %596
    %v599 = vlaneseq
    %v600 = vshrl.u32 %v599, 7
    %v601 = vsub.s32 0, %v600
    %v602 = vrot.slane %v597, %v601
    %v603 = vlaneseq
    %v604 = vshrl.u32 %v603, 7
    %v605 = vsub.s32 1, %v604
    %v606 = vrot.slane %v597, %v605
    %v607 = vlaneseq
    %v608 = vshrl.u32 %v607, 7
    %v609 = vsub.s32 2, %v608
    %v610 = vrot.slane %v597, %v609
    %v611 = vlaneseq
    %v612 = vshrl.u32 %v611, 7
    %v613 = vsub.s32 3, %v612
    %v614 = vrot.slane %v597, %v613
    %v615 = vlaneseq
    %v616 = vshrl.u32 %v615, 7
    %v617 = vsub.s32 4, %v616
    %v618 = vrot.slane %v597, %v617
    %v619 = vlaneseq
    %v620 = vshrl.u32 %v619, 7
    %v621 = vsub.s32 5, %v620
    %v622 = vrot.slane %v597, %v621
    %v623 = vlaneseq
    %v624 = vshrl.u32 %v623, 7
    %v625 = vsub.s32 6, %v624
    %v626 = vrot.slane %v597, %v625
    %v627 = vlaneseq
    %v628 = vshrl.u32 %v627, 7
    %v629 = vsub.s32 7, %v628
    %v630 = vrot.slane %v597, %v629
    %v639 = vsub.f32 %v529, %v602
    %v640 = vsub.f32 %v530, %v606
    %v641 = vsub.f32 %v531, %v610
    %v642 = vsub.f32 %v532, %v614
    %v643 = vsub.f32 %v533, %v618
    %v644 = vsub.f32 %v534, %v622
    %v645 = vsub.f32 %v535, %v626
    %v646 = vsub.f32 %v536, %v630
    %v647 = vmul.f32 %v639, 1.442695
    %v648 = vpow.pop %v647
    %v649 = vmul.f32 %v640, 1.442695
    %v650 = vpow.pop %v649
    %v651 = vmul.f32 %v641, 1.442695
    %v652 = vpow.pop %v651
    %v653 = vmul.f32 %v642, 1.442695
    %v654 = vpow.pop %v653
    %v655 = vmul.f32 %v643, 1.442695
    %v656 = vpow.pop %v655
    %v657 = vmul.f32 %v644, 1.442695
    %v658 = vpow.pop %v657
    %v659 = vmul.f32 %v645, 1.442695
    %v660 = vpow.pop %v659
    %v661 = vmul.f32 %v646, 1.442695
    %v662 = vpow.pop %v661
    %671 = vset.pattern.permute.xlu0 0
    %672 = vperm.xlu0 %671, %v648
    %v673 = vpop.permute.xlu0 %672
    %674 = vset.pattern.permute.xlu0 0
    %675 = vperm.xlu0 %674, %v650
    %v676 = vpop.permute.xlu0 %675
    %677 = vset.pattern.permute.xlu0 0
    %678 = vperm.xlu0 %677, %v652
    %v679 = vpop.permute.xlu0 %678
    %680 = vset.pattern.permute.xlu0 0
    %681 = vperm.xlu0 %680, %v654
    %v682 = vpop.permute.xlu0 %681
    %683 = vset.pattern.permute.xlu0 0
    %684 = vperm.xlu0 %683, %v656
    %v685 = vpop.permute.xlu0 %684
    %686 = vset.pattern.permute.xlu0 0
    %687 = vperm.xlu0 %686, %v658
    %v688 = vpop.permute.xlu0 %687
    %689 = vset.pattern.permute.xlu0 0
    %690 = vperm.xlu0 %689, %v660
    %v691 = vpop.permute.xlu0 %690
    %692 = vset.pattern.permute.xlu0 0
    %693 = vperm.xlu0 %692, %v662
    %v694 = vpop.permute.xlu0 %693
    %v695 = vlaneseq
    %v696 = vshrl.u32 %v695, 7
    %v697 = vsub.s32 %v546, %v696
    %v698 = vrot.slane %v673, %v697
    %v699 = vlaneseq
    %v700 = vshrl.u32 %v699, 7
    %v701 = vsub.s32 %v546, %v700
    %v702 = vrot.slane %v676, %v701
    %v703 = vlaneseq
    %v704 = vshrl.u32 %v703, 7
    %v705 = vsub.s32 %v546, %v704
    %v706 = vrot.slane %v679, %v705
    %v707 = vlaneseq
    %v708 = vshrl.u32 %v707, 7
    %v709 = vsub.s32 %v546, %v708
    %v710 = vrot.slane %v682, %v709
    %v711 = vlaneseq
    %v712 = vshrl.u32 %v711, 7
    %v713 = vsub.s32 %v546, %v712
    %v714 = vrot.slane %v685, %v713
    %v715 = vlaneseq
    %v716 = vshrl.u32 %v715, 7
    %v717 = vsub.s32 %v546, %v716
    %v718 = vrot.slane %v688, %v717
    %v719 = vlaneseq
    %v720 = vshrl.u32 %v719, 7
    %v721 = vsub.s32 %v546, %v720
    %v722 = vrot.slane %v691, %v721
    %v723 = vlaneseq
    %v724 = vshrl.u32 %v723, 7
    %v725 = vsub.s32 %v546, %v724
    %v726 = vrot.slane %v694, %v725
    %v727 = vsel %vm579, %v702, %v698
    %v728 = vsel %vm581, %v706, %v727
    %v729 = vsel %vm583, %v710, %v728
    %v730 = vsel %vm585, %v714, %v729
    %v731 = vsel %vm587, %v718, %v730
    %v732 = vsel %vm589, %v722, %v731
    %v733 = vsel %vm591, %v726, %v732
    %v735 = vsel %vm594, %v733, 0.0
    %736 = vadd.xlane.f32.xlu0 %v735
    %v737 = vpop.xlane.xlu0 %736
    %v739 = vlaneseq
    %v740 = vshrl.u32 %v739, 7
    %v741 = vsub.s32 0, %v740
    %v742 = vrot.slane %v737, %v741
    %v743 = vlaneseq
    %v744 = vshrl.u32 %v743, 7
    %v745 = vsub.s32 1, %v744
    %v746 = vrot.slane %v737, %v745
    %v747 = vlaneseq
    %v748 = vshrl.u32 %v747, 7
    %v749 = vsub.s32 2, %v748
    %v750 = vrot.slane %v737, %v749
    %v751 = vlaneseq
    %v752 = vshrl.u32 %v751, 7
    %v753 = vsub.s32 3, %v752
    %v754 = vrot.slane %v737, %v753
    %v755 = vlaneseq
    %v756 = vshrl.u32 %v755, 7
    %v757 = vsub.s32 4, %v756
    %v758 = vrot.slane %v737, %v757
    %v759 = vlaneseq
    %v760 = vshrl.u32 %v759, 7
    %v761 = vsub.s32 5, %v760
    %v762 = vrot.slane %v737, %v761
    %v763 = vlaneseq
    %v764 = vshrl.u32 %v763, 7
    %v765 = vsub.s32 6, %v764
    %v766 = vrot.slane %v737, %v765
    %v767 = vlaneseq
    %v768 = vshrl.u32 %v767, 7
    %v769 = vsub.s32 7, %v768
    %v770 = vrot.slane %v737, %v769
    %v779 = vrcp.pop %v742
    %v780 = vmul.f32 %v648, %v779
    %v781 = vrcp.pop %v746
    %v782 = vmul.f32 %v650, %v781
    %v783 = vrcp.pop %v750
    %v784 = vmul.f32 %v652, %v783
    %v785 = vrcp.pop %v754
    %v786 = vmul.f32 %v654, %v785
    %v787 = vrcp.pop %v758
    %v788 = vmul.f32 %v656, %v787
    %v789 = vrcp.pop %v762
    %v790 = vmul.f32 %v658, %v789
    %v791 = vrcp.pop %v766
    %v792 = vmul.f32 %v660, %v791
    %v793 = vrcp.pop %v770
    %v794 = vmul.f32 %v662, %v793
    %796 = vset.pattern.permute.xlu0 0
    %797 = vperm.xlu0 %796, %v780
    %v798 = vpop.permute.xlu0 %797
    %v799 = vlaneseq
    %v800 = vshrl.u32 %v799, 7
    %v801 = vsub.s32 %v546, %v800
    %v802 = vrot.slane %v798, %v801
    %v803 = vsel %vm594, %v802, 0
    %805 = vmatprep.subr.mxu0 0.0
    %806 = vmatpush1.msra.mxu0 %v84
    %807 = vmatprep.subr.mxu0 0.0
    %808 = vmatpush1.msra.mxu0 0.0
    %809 = vmatprep.subr.mxu0 0.0
    %810 = vmatpush1.msra.mxu0 0.0
    %811 = vmatprep.subr.mxu0 0.0
    %812 = vmatpush1.msra.mxu0 0.0
    %813 = vmatprep.subr.mxu0 0.0
    %814 = vmatpush1.msra.mxu0 0.0
    %815 = vmatprep.subr.mxu0 0.0
    %816 = vmatpush1.msra.mxu0 0.0
    %817 = vmatprep.subr.mxu0 0.0
    %818 = vmatpush1.msra.mxu0 0.0
    %819 = vmatprep.subr.mxu0 0.0
    %820 = vmatpush1.msra.mxu0 0.0
    %821 = vmatprep.subr.mxu0 0.0
    %822 = vmatpush1.msra.mxu0 0.0
    %823 = vmatprep.subr.mxu0 0.0
    %824 = vmatpush1.msra.mxu0 0.0
    %825 = vmatprep.subr.mxu0 0.0
    %826 = vmatpush1.msra.mxu0 0.0
    %827 = vmatprep.subr.mxu0 0.0
    %828 = vmatpush1.msra.mxu0 0.0
    %829 = vmatprep.subr.mxu0 0.0
    %830 = vmatpush1.msra.mxu0 0.0
    %831 = vmatprep.subr.mxu0 0.0
    %832 = vmatpush1.msra.mxu0 0.0
    %833 = vmatprep.subr.mxu0 0.0
    %834 = vmatpush1.msra.mxu0 0.0
    %835 = vmatprep.subr.mxu0 0.0
    %836 = vmatpush1.msra.mxu0 0.0
    %837 = vmatprep.subr.mxu0 0.0
    %838 = vmatpush1.msra.mxu0 0.0
    %839 = vmatprep.subr.mxu0 0.0
    %840 = vmatpush1.msra.mxu0 0.0
    %841 = vmatprep.subr.mxu0 0.0
    %842 = vmatpush1.msra.mxu0 0.0
    %843 = vmatprep.subr.mxu0 0.0
    %844 = vmatpush1.msra.mxu0 0.0
    %845 = vmatprep.subr.mxu0 0.0
    %846 = vmatpush1.msra.mxu0 0.0
    %847 = vmatprep.subr.mxu0 0.0
    %848 = vmatpush1.msra.mxu0 0.0
    %849 = vmatprep.subr.mxu0 0.0
    %850 = vmatpush1.msra.mxu0 0.0
    %851 = vmatprep.subr.mxu0 0.0
    %852 = vmatpush1.msra.mxu0 0.0
    %853 = vmatprep.subr.mxu0 0.0
    %854 = vmatpush1.msra.mxu0 0.0
    %855 = vmatprep.subr.mxu0 0.0
    %856 = vmatpush1.msra.mxu0 0.0
    %857 = vmatprep.subr.mxu0 0.0
    %858 = vmatpush1.msra.mxu0 0.0
    %859 = vmatprep.subr.mxu0 0.0
    %860 = vmatpush1.msra.mxu0 0.0
    %861 = vmatprep.subr.mxu0 0.0
    %862 = vmatpush1.msra.mxu0 0.0
    %863 = vmatprep.subr.mxu0 0.0
    %864 = vmatpush1.msra.mxu0 0.0
    %865 = vmatprep.subr.mxu0 0.0
    %866 = vmatpush1.msra.mxu0 0.0
    %867 = vmatprep.subr.mxu0 0.0
    %868 = vmatpush1.msra.mxu0 0.0
    %869 = vmatprep.mubr.f32.mxu0 0.0
    %870 = vmatmul.mubr.f32.gmra.mrb[0].mxu0 %v803
    %v871 = vpop.f32.mrb[0].mxu0
    %v872 = vadd.f32 0.0, %v871
    %v873 = vpop.f32.mrb[0].mxu0
    %874 = vdwg.mxu0
    %876 = vset.pattern.permute.xlu0 0
    %877 = vperm.xlu0 %876, %v782
    %v878 = vpop.permute.xlu0 %877
    %v879 = vlaneseq
    %v880 = vshrl.u32 %v879, 7
    %v881 = vsub.s32 %v546, %v880
    %v882 = vrot.slane %v878, %v881
    %v883 = vsel %vm594, %v882, 0
    %885 = vmatprep.subr.mxu0 0.0
    %886 = vmatpush1.msra.mxu0 %v85
    %887 = vmatprep.subr.mxu0 0.0
    %888 = vmatpush1.msra.mxu0 0.0
    %889 = vmatprep.subr.mxu0 0.0
    %890 = vmatpush1.msra.mxu0 0.0
    %891 = vmatprep.subr.mxu0 0.0
    %892 = vmatpush1.msra.mxu0 0.0
    %893 = vmatprep.subr.mxu0 0.0
    %894 = vmatpush1.msra.mxu0 0.0
    %895 = vmatprep.subr.mxu0 0.0
    %896 = vmatpush1.msra.mxu0 0.0
    %897 = vmatprep.subr.mxu0 0.0
    %898 = vmatpush1.msra.mxu0 0.0
    %899 = vmatprep.subr.mxu0 0.0
    %900 = vmatpush1.msra.mxu0 0.0
    %901 = vmatprep.subr.mxu0 0.0
    %902 = vmatpush1.msra.mxu0 0.0
    %903 = vmatprep.subr.mxu0 0.0
    %904 = vmatpush1.msra.mxu0 0.0
    %905 = vmatprep.subr.mxu0 0.0
    %906 = vmatpush1.msra.mxu0 0.0
    %907 = vmatprep.subr.mxu0 0.0
    %908 = vmatpush1.msra.mxu0 0.0
    %909 = vmatprep.subr.mxu0 0.0
    %910 = vmatpush1.msra.mxu0 0.0
    %911 = vmatprep.subr.mxu0 0.0
    %912 = vmatpush1.msra.mxu0 0.0
    %913 = vmatprep.subr.mxu0 0.0
    %914 = vmatpush1.msra.mxu0 0.0
    %915 = vmatprep.subr.mxu0 0.0
    %916 = vmatpush1.msra.mxu0 0.0
    %917 = vmatprep.subr.mxu0 0.0
    %918 = vmatpush1.msra.mxu0 0.0
    %919 = vmatprep.subr.mxu0 0.0
    %920 = vmatpush1.msra.mxu0 0.0
    %921 = vmatprep.subr.mxu0 0.0
    %922 = vmatpush1.msra.mxu0 0.0
    %923 = vmatprep.subr.mxu0 0.0
    %924 = vmatpush1.msra.mxu0 0.0
    %925 = vmatprep.subr.mxu0 0.0
    %926 = vmatpush1.msra.mxu0 0.0
    %927 = vmatprep.subr.mxu0 0.0
    %928 = vmatpush1.msra.mxu0 0.0
    %929 = vmatprep.subr.mxu0 0.0
    %930 = vmatpush1.msra.mxu0 0.0
    %931 = vmatprep.subr.mxu0 0.0
    %932 = vmatpush1.msra.mxu0 0.0
    %933 = vmatprep.subr.mxu0 0.0
    %934 = vmatpush1.msra.mxu0 0.0
    %935 = vmatprep.subr.mxu0 0.0
    %936 = vmatpush1.msra.mxu0 0.0
    %937 = vmatprep.subr.mxu0 0.0
    %938 = vmatpush1.msra.mxu0 0.0
    %939 = vmatprep.subr.mxu0 0.0
    %940 = vmatpush1.msra.mxu0 0.0
    %941 = vmatprep.subr.mxu0 0.0
    %942 = vmatpush1.msra.mxu0 0.0
    %943 = vmatprep.subr.mxu0 0.0
    %944 = vmatpush1.msra.mxu0 0.0
    %945 = vmatprep.subr.mxu0 0.0
    %946 = vmatpush1.msra.mxu0 0.0
    %947 = vmatprep.subr.mxu0 0.0
    %948 = vmatpush1.msra.mxu0 0.0
    %949 = vmatprep.mubr.f32.mxu0 0.0
    %950 = vmatmul.mubr.f32.gmra.mrb[0].mxu0 %v883
    %v951 = vpop.f32.mrb[0].mxu0
    %v952 = vadd.f32 0.0, %v951
    %v953 = vpop.f32.mrb[0].mxu0
    %954 = vdwg.mxu0
    %956 = vset.pattern.permute.xlu0 0
    %957 = vperm.xlu0 %956, %v784
    %v958 = vpop.permute.xlu0 %957
    %v959 = vlaneseq
    %v960 = vshrl.u32 %v959, 7
    %v961 = vsub.s32 %v546, %v960
    %v962 = vrot.slane %v958, %v961
    %v963 = vsel %vm594, %v962, 0
    %965 = vmatprep.subr.mxu0 0.0
    %966 = vmatpush1.msra.mxu0 %v86
    %967 = vmatprep.subr.mxu0 0.0
    %968 = vmatpush1.msra.mxu0 0.0
    %969 = vmatprep.subr.mxu0 0.0
    %970 = vmatpush1.msra.mxu0 0.0
    %971 = vmatprep.subr.mxu0 0.0
    %972 = vmatpush1.msra.mxu0 0.0
    %973 = vmatprep.subr.mxu0 0.0
    %974 = vmatpush1.msra.mxu0 0.0
    %975 = vmatprep.subr.mxu0 0.0
    %976 = vmatpush1.msra.mxu0 0.0
    %977 = vmatprep.subr.mxu0 0.0
    %978 = vmatpush1.msra.mxu0 0.0
    %979 = vmatprep.subr.mxu0 0.0
    %980 = vmatpush1.msra.mxu0 0.0
    %981 = vmatprep.subr.mxu0 0.0
    %982 = vmatpush1.msra.mxu0 0.0
    %983 = vmatprep.subr.mxu0 0.0
    %984 = vmatpush1.msra.mxu0 0.0
    %985 = vmatprep.subr.mxu0 0.0
    %986 = vmatpush1.msra.mxu0 0.0
    %987 = vmatprep.subr.mxu0 0.0
    %988 = vmatpush1.msra.mxu0 0.0
    %989 = vmatprep.subr.mxu0 0.0
    %990 = vmatpush1.msra.mxu0 0.0
    %991 = vmatprep.subr.mxu0 0.0
    %992 = vmatpush1.msra.mxu0 0.0
    %993 = vmatprep.subr.mxu0 0.0
    %994 = vmatpush1.msra.mxu0 0.0
    %995 = vmatprep.subr.mxu0 0.0
    %996 = vmatpush1.msra.mxu0 0.0
    %997 = vmatprep.subr.mxu0 0.0
    %998 = vmatpush1.msra.mxu0 0.0
    %999 = vmatprep.subr.mxu0 0.0
    %1000 = vmatpush1.msra.mxu0 0.0
    %1001 = vmatprep.subr.mxu0 0.0
    %1002 = vmatpush1.msra.mxu0 0.0
    %1003 = vmatprep.subr.mxu0 0.0
    %1004 = vmatpush1.msra.mxu0 0.0
    %1005 = vmatprep.subr.mxu0 0.0
    %1006 = vmatpush1.msra.mxu0 0.0
    %1007 = vmatprep.subr.mxu0 0.0
    %1008 = vmatpush1.msra.mxu0 0.0
    %1009 = vmatprep.subr.mxu0 0.0
    %1010 = vmatpush1.msra.mxu0 0.0
    %1011 = vmatprep.subr.mxu0 0.0
    %1012 = vmatpush1.msra.mxu0 0.0
    %1013 = vmatprep.subr.mxu0 0.0
    %1014 = vmatpush1.msra.mxu0 0.0
    %1015 = vmatprep.subr.mxu0 0.0
    %1016 = vmatpush1.msra.mxu0 0.0
    %1017 = vmatprep.subr.mxu0 0.0
    %1018 = vmatpush1.msra.mxu0 0.0
    %1019 = vmatprep.subr.mxu0 0.0
    %1020 = vmatpush1.msra.mxu0 0.0
    %1021 = vmatprep.subr.mxu0 0.0
    %1022 = vmatpush1.msra.mxu0 0.0
    %1023 = vmatprep.subr.mxu0 0.0
    %1024 = vmatpush1.msra.mxu0 0.0
    %1025 = vmatprep.subr.mxu0 0.0
    %1026 = vmatpush1.msra.mxu0 0.0
    %1027 = vmatprep.subr.mxu0 0.0
    %1028 = vmatpush1.msra.mxu0 0.0
    %1029 = vmatprep.mubr.f32.mxu0 0.0
    %1030 = vmatmul.mubr.f32.gmra.mrb[0].mxu0 %v963
    %v1031 = vpop.f32.mrb[0].mxu0
    %v1032 = vadd.f32 0.0, %v1031
    %v1033 = vpop.f32.mrb[0].mxu0
    %1034 = vdwg.mxu0
    %1036 = vset.pattern.permute.xlu0 0
    %1037 = vperm.xlu0 %1036, %v786
    %v1038 = vpop.permute.xlu0 %1037
    %v1039 = vlaneseq
    %v1040 = vshrl.u32 %v1039, 7
    %v1041 = vsub.s32 %v546, %v1040
    %v1042 = vrot.slane %v1038, %v1041
    %v1043 = vsel %vm594, %v1042, 0
    %1045 = vmatprep.subr.mxu0 0.0
    %1046 = vmatpush1.msra.mxu0 %v87
    %1047 = vmatprep.subr.mxu0 0.0
    %1048 = vmatpush1.msra.mxu0 0.0
    %1049 = vmatprep.subr.mxu0 0.0
    %1050 = vmatpush1.msra.mxu0 0.0
    %1051 = vmatprep.subr.mxu0 0.0
    %1052 = vmatpush1.msra.mxu0 0.0
    %1053 = vmatprep.subr.mxu0 0.0
    %1054 = vmatpush1.msra.mxu0 0.0
    %1055 = vmatprep.subr.mxu0 0.0
    %1056 = vmatpush1.msra.mxu0 0.0
    %1057 = vmatprep.subr.mxu0 0.0
    %1058 = vmatpush1.msra.mxu0 0.0
    %1059 = vmatprep.subr.mxu0 0.0
    %1060 = vmatpush1.msra.mxu0 0.0
    %1061 = vmatprep.subr.mxu0 0.0
    %1062 = vmatpush1.msra.mxu0 0.0
    %1063 = vmatprep.subr.mxu0 0.0
    %1064 = vmatpush1.msra.mxu0 0.0
    %1065 = vmatprep.subr.mxu0 0.0
    %1066 = vmatpush1.msra.mxu0 0.0
    %1067 = vmatprep.subr.mxu0 0.0
    %1068 = vmatpush1.msra.mxu0 0.0
    %1069 = vmatprep.subr.mxu0 0.0
    %1070 = vmatpush1.msra.mxu0 0.0
    %1071 = vmatprep.subr.mxu0 0.0
    %1072 = vmatpush1.msra.mxu0 0.0
    %1073 = vmatprep.subr.mxu0 0.0
    %1074 = vmatpush1.msra.mxu0 0.0
    %1075 = vmatprep.subr.mxu0 0.0
    %1076 = vmatpush1.msra.mxu0 0.0
    %1077 = vmatprep.subr.mxu0 0.0
    %1078 = vmatpush1.msra.mxu0 0.0
    %1079 = vmatprep.subr.mxu0 0.0
    %1080 = vmatpush1.msra.mxu0 0.0
    %1081 = vmatprep.subr.mxu0 0.0
    %1082 = vmatpush1.msra.mxu0 0.0
    %1083 = vmatprep.subr.mxu0 0.0
    %1084 = vmatpush1.msra.mxu0 0.0
    %1085 = vmatprep.subr.mxu0 0.0
    %1086 = vmatpush1.msra.mxu0 0.0
    %1087 = vmatprep.subr.mxu0 0.0
    %1088 = vmatpush1.msra.mxu0 0.0
    %1089 = vmatprep.subr.mxu0 0.0
    %1090 = vmatpush1.msra.mxu0 0.0
    %1091 = vmatprep.subr.mxu0 0.0
    %1092 = vmatpush1.msra.mxu0 0.0
    %1093 = vmatprep.subr.mxu0 0.0
    %1094 = vmatpush1.msra.mxu0 0.0
    %1095 = vmatprep.subr.mxu0 0.0
    %1096 = vmatpush1.msra.mxu0 0.0
    %1097 = vmatprep.subr.mxu0 0.0
    %1098 = vmatpush1.msra.mxu0 0.0
    %1099 = vmatprep.subr.mxu0 0.0
    %1100 = vmatpush1.msra.mxu0 0.0
    %1101 = vmatprep.subr.mxu0 0.0
    %1102 = vmatpush1.msra.mxu0 0.0
    %1103 = vmatprep.subr.mxu0 0.0
    %1104 = vmatpush1.msra.mxu0 0.0
    %1105 = vmatprep.subr.mxu0 0.0
    %1106 = vmatpush1.msra.mxu0 0.0
    %1107 = vmatprep.subr.mxu0 0.0
    %1108 = vmatpush1.msra.mxu0 0.0
    %1109 = vmatprep.mubr.f32.mxu0 0.0
    %1110 = vmatmul.mubr.f32.gmra.mrb[0].mxu0 %v1043
    %v1111 = vpop.f32.mrb[0].mxu0
    %v1112 = vadd.f32 0.0, %v1111
    %v1113 = vpop.f32.mrb[0].mxu0
    %1114 = vdwg.mxu0
    %1116 = vset.pattern.permute.xlu0 0
    %1117 = vperm.xlu0 %1116, %v788
    %v1118 = vpop.permute.xlu0 %1117
    %v1119 = vlaneseq
    %v1120 = vshrl.u32 %v1119, 7
    %v1121 = vsub.s32 %v546, %v1120
    %v1122 = vrot.slane %v1118, %v1121
    %v1123 = vsel %vm594, %v1122, 0
    %1125 = vmatprep.subr.mxu0 0.0
    %1126 = vmatpush1.msra.mxu0 %v88
    %1127 = vmatprep.subr.mxu0 0.0
    %1128 = vmatpush1.msra.mxu0 0.0
    %1129 = vmatprep.subr.mxu0 0.0
    %1130 = vmatpush1.msra.mxu0 0.0
    %1131 = vmatprep.subr.mxu0 0.0
    %1132 = vmatpush1.msra.mxu0 0.0
    %1133 = vmatprep.subr.mxu0 0.0
    %1134 = vmatpush1.msra.mxu0 0.0
    %1135 = vmatprep.subr.mxu0 0.0
    %1136 = vmatpush1.msra.mxu0 0.0
    %1137 = vmatprep.subr.mxu0 0.0
    %1138 = vmatpush1.msra.mxu0 0.0
    %1139 = vmatprep.subr.mxu0 0.0
    %1140 = vmatpush1.msra.mxu0 0.0
    %1141 = vmatprep.subr.mxu0 0.0
    %1142 = vmatpush1.msra.mxu0 0.0
    %1143 = vmatprep.subr.mxu0 0.0
    %1144 = vmatpush1.msra.mxu0 0.0
    %1145 = vmatprep.subr.mxu0 0.0
    %1146 = vmatpush1.msra.mxu0 0.0
    %1147 = vmatprep.subr.mxu0 0.0
    %1148 = vmatpush1.msra.mxu0 0.0
    %1149 = vmatprep.subr.mxu0 0.0
    %1150 = vmatpush1.msra.mxu0 0.0
    %1151 = vmatprep.subr.mxu0 0.0
    %1152 = vmatpush1.msra.mxu0 0.0
    %1153 = vmatprep.subr.mxu0 0.0
    %1154 = vmatpush1.msra.mxu0 0.0
    %1155 = vmatprep.subr.mxu0 0.0
    %1156 = vmatpush1.msra.mxu0 0.0
    %1157 = vmatprep.subr.mxu0 0.0
    %1158 = vmatpush1.msra.mxu0 0.0
    %1159 = vmatprep.subr.mxu0 0.0
    %1160 = vmatpush1.msra.mxu0 0.0
    %1161 = vmatprep.subr.mxu0 0.0
    %1162 = vmatpush1.msra.mxu0 0.0
    %1163 = vmatprep.subr.mxu0 0.0
    %1164 = vmatpush1.msra.mxu0 0.0
    %1165 = vmatprep.subr.mxu0 0.0
    %1166 = vmatpush1.msra.mxu0 0.0
    %1167 = vmatprep.subr.mxu0 0.0
    %1168 = vmatpush1.msra.mxu0 0.0
    %1169 = vmatprep.subr.mxu0 0.0
    %1170 = vmatpush1.msra.mxu0 0.0
    %1171 = vmatprep.subr.mxu0 0.0
    %1172 = vmatpush1.msra.mxu0 0.0
    %1173 = vmatprep.subr.mxu0 0.0
    %1174 = vmatpush1.msra.mxu0 0.0
    %1175 = vmatprep.subr.mxu0 0.0
    %1176 = vmatpush1.msra.mxu0 0.0
    %1177 = vmatprep.subr.mxu0 0.0
    %1178 = vmatpush1.msra.mxu0 0.0
    %1179 = vmatprep.subr.mxu0 0.0
    %1180 = vmatpush1.msra.mxu0 0.0
    %1181 = vmatprep.subr.mxu0 0.0
    %1182 = vmatpush1.msra.mxu0 0.0
    %1183 = vmatprep.subr.mxu0 0.0
    %1184 = vmatpush1.msra.mxu0 0.0
    %1185 = vmatprep.subr.mxu0 0.0
    %1186 = vmatpush1.msra.mxu0 0.0
    %1187 = vmatprep.subr.mxu0 0.0
    %1188 = vmatpush1.msra.mxu0 0.0
    %1189 = vmatprep.mubr.f32.mxu0 0.0
    %1190 = vmatmul.mubr.f32.gmra.mrb[0].mxu0 %v1123
    %v1191 = vpop.f32.mrb[0].mxu0
    %v1192 = vadd.f32 0.0, %v1191
    %v1193 = vpop.f32.mrb[0].mxu0
    %1194 = vdwg.mxu0
    %1196 = vset.pattern.permute.xlu0 0
    %1197 = vperm.xlu0 %1196, %v790
    %v1198 = vpop.permute.xlu0 %1197
    %v1199 = vlaneseq
    %v1200 = vshrl.u32 %v1199, 7
    %v1201 = vsub.s32 %v546, %v1200
    %v1202 = vrot.slane %v1198, %v1201
    %v1203 = vsel %vm594, %v1202, 0
    %1205 = vmatprep.subr.mxu0 0.0
    %1206 = vmatpush1.msra.mxu0 %v89
    %1207 = vmatprep.subr.mxu0 0.0
    %1208 = vmatpush1.msra.mxu0 0.0
    %1209 = vmatprep.subr.mxu0 0.0
    %1210 = vmatpush1.msra.mxu0 0.0
    %1211 = vmatprep.subr.mxu0 0.0
    %1212 = vmatpush1.msra.mxu0 0.0
    %1213 = vmatprep.subr.mxu0 0.0
    %1214 = vmatpush1.msra.mxu0 0.0
    %1215 = vmatprep.subr.mxu0 0.0
    %1216 = vmatpush1.msra.mxu0 0.0
    %1217 = vmatprep.subr.mxu0 0.0
    %1218 = vmatpush1.msra.mxu0 0.0
    %1219 = vmatprep.subr.mxu0 0.0
    %1220 = vmatpush1.msra.mxu0 0.0
    %1221 = vmatprep.subr.mxu0 0.0
    %1222 = vmatpush1.msra.mxu0 0.0
    %1223 = vmatprep.subr.mxu0 0.0
    %1224 = vmatpush1.msra.mxu0 0.0
    %1225 = vmatprep.subr.mxu0 0.0
    %1226 = vmatpush1.msra.mxu0 0.0
    %1227 = vmatprep.subr.mxu0 0.0
    %1228 = vmatpush1.msra.mxu0 0.0
    %1229 = vmatprep.subr.mxu0 0.0
    %1230 = vmatpush1.msra.mxu0 0.0
    %1231 = vmatprep.subr.mxu0 0.0
    %1232 = vmatpush1.msra.mxu0 0.0
    %1233 = vmatprep.subr.mxu0 0.0
    %1234 = vmatpush1.msra.mxu0 0.0
    %1235 = vmatprep.subr.mxu0 0.0
    %1236 = vmatpush1.msra.mxu0 0.0
    %1237 = vmatprep.subr.mxu0 0.0
    %1238 = vmatpush1.msra.mxu0 0.0
    %1239 = vmatprep.subr.mxu0 0.0
    %1240 = vmatpush1.msra.mxu0 0.0
    %1241 = vmatprep.subr.mxu0 0.0
    %1242 = vmatpush1.msra.mxu0 0.0
    %1243 = vmatprep.subr.mxu0 0.0
    %1244 = vmatpush1.msra.mxu0 0.0
    %1245 = vmatprep.subr.mxu0 0.0
    %1246 = vmatpush1.msra.mxu0 0.0
    %1247 = vmatprep.subr.mxu0 0.0
    %1248 = vmatpush1.msra.mxu0 0.0
    %1249 = vmatprep.subr.mxu0 0.0
    %1250 = vmatpush1.msra.mxu0 0.0
    %1251 = vmatprep.subr.mxu0 0.0
    %1252 = vmatpush1.msra.mxu0 0.0
    %1253 = vmatprep.subr.mxu0 0.0
    %1254 = vmatpush1.msra.mxu0 0.0
    %1255 = vmatprep.subr.mxu0 0.0
    %1256 = vmatpush1.msra.mxu0 0.0
    %1257 = vmatprep.subr.mxu0 0.0
    %1258 = vmatpush1.msra.mxu0 0.0
    %1259 = vmatprep.subr.mxu0 0.0
    %1260 = vmatpush1.msra.mxu0 0.0
    %1261 = vmatprep.subr.mxu0 0.0
    %1262 = vmatpush1.msra.mxu0 0.0
    %1263 = vmatprep.subr.mxu0 0.0
    %1264 = vmatpush1.msra.mxu0 0.0
    %1265 = vmatprep.subr.mxu0 0.0
    %1266 = vmatpush1.msra.mxu0 0.0
    %1267 = vmatprep.subr.mxu0 0.0
    %1268 = vmatpush1.msra.mxu0 0.0
    %1269 = vmatprep.mubr.f32.mxu0 0.0
    %1270 = vmatmul.mubr.f32.gmra.mrb[0].mxu0 %v1203
    %v1271 = vpop.f32.mrb[0].mxu0
    %v1272 = vadd.f32 0.0, %v1271
    %v1273 = vpop.f32.mrb[0].mxu0
    %1274 = vdwg.mxu0
    %1276 = vset.pattern.permute.xlu0 0
    %1277 = vperm.xlu0 %1276, %v792
    %v1278 = vpop.permute.xlu0 %1277
    %v1279 = vlaneseq
    %v1280 = vshrl.u32 %v1279, 7
    %v1281 = vsub.s32 %v546, %v1280
    %v1282 = vrot.slane %v1278, %v1281
    %v1283 = vsel %vm594, %v1282, 0
    %1285 = vmatprep.subr.mxu0 0.0
    %1286 = vmatpush1.msra.mxu0 %v90
    %1287 = vmatprep.subr.mxu0 0.0
    %1288 = vmatpush1.msra.mxu0 0.0
    %1289 = vmatprep.subr.mxu0 0.0
    %1290 = vmatpush1.msra.mxu0 0.0
    %1291 = vmatprep.subr.mxu0 0.0
    %1292 = vmatpush1.msra.mxu0 0.0
    %1293 = vmatprep.subr.mxu0 0.0
    %1294 = vmatpush1.msra.mxu0 0.0
    %1295 = vmatprep.subr.mxu0 0.0
    %1296 = vmatpush1.msra.mxu0 0.0
    %1297 = vmatprep.subr.mxu0 0.0
    %1298 = vmatpush1.msra.mxu0 0.0
    %1299 = vmatprep.subr.mxu0 0.0
    %1300 = vmatpush1.msra.mxu0 0.0
    %1301 = vmatprep.subr.mxu0 0.0
    %1302 = vmatpush1.msra.mxu0 0.0
    %1303 = vmatprep.subr.mxu0 0.0
    %1304 = vmatpush1.msra.mxu0 0.0
    %1305 = vmatprep.subr.mxu0 0.0
    %1306 = vmatpush1.msra.mxu0 0.0
    %1307 = vmatprep.subr.mxu0 0.0
    %1308 = vmatpush1.msra.mxu0 0.0
    %1309 = vmatprep.subr.mxu0 0.0
    %1310 = vmatpush1.msra.mxu0 0.0
    %1311 = vmatprep.subr.mxu0 0.0
    %1312 = vmatpush1.msra.mxu0 0.0
    %1313 = vmatprep.subr.mxu0 0.0
    %1314 = vmatpush1.msra.mxu0 0.0
    %1315 = vmatprep.subr.mxu0 0.0
    %1316 = vmatpush1.msra.mxu0 0.0
    %1317 = vmatprep.subr.mxu0 0.0
    %1318 = vmatpush1.msra.mxu0 0.0
    %1319 = vmatprep.subr.mxu0 0.0
    %1320 = vmatpush1.msra.mxu0 0.0
    %1321 = vmatprep.subr.mxu0 0.0
    %1322 = vmatpush1.msra.mxu0 0.0
    %1323 = vmatprep.subr.mxu0 0.0
    %1324 = vmatpush1.msra.mxu0 0.0
    %1325 = vmatprep.subr.mxu0 0.0
    %1326 = vmatpush1.msra.mxu0 0.0
    %1327 = vmatprep.subr.mxu0 0.0
    %1328 = vmatpush1.msra.mxu0 0.0
    %1329 = vmatprep.subr.mxu0 0.0
    %1330 = vmatpush1.msra.mxu0 0.0
    %1331 = vmatprep.subr.mxu0 0.0
    %1332 = vmatpush1.msra.mxu0 0.0
    %1333 = vmatprep.subr.mxu0 0.0
    %1334 = vmatpush1.msra.mxu0 0.0
    %1335 = vmatprep.subr.mxu0 0.0
    %1336 = vmatpush1.msra.mxu0 0.0
    %1337 = vmatprep.subr.mxu0 0.0
    %1338 = vmatpush1.msra.mxu0 0.0
    %1339 = vmatprep.subr.mxu0 0.0
    %1340 = vmatpush1.msra.mxu0 0.0
    %1341 = vmatprep.subr.mxu0 0.0
    %1342 = vmatpush1.msra.mxu0 0.0
    %1343 = vmatprep.subr.mxu0 0.0
    %1344 = vmatpush1.msra.mxu0 0.0
    %1345 = vmatprep.subr.mxu0 0.0
    %1346 = vmatpush1.msra.mxu0 0.0
    %1347 = vmatprep.subr.mxu0 0.0
    %1348 = vmatpush1.msra.mxu0 0.0
    %1349 = vmatprep.mubr.f32.mxu0 0.0
    %1350 = vmatmul.mubr.f32.gmra.mrb[0].mxu0 %v1283
    %v1351 = vpop.f32.mrb[0].mxu0
    %v1352 = vadd.f32 0.0, %v1351
    %v1353 = vpop.f32.mrb[0].mxu0
    %1354 = vdwg.mxu0
    %1356 = vset.pattern.permute.xlu0 0
    %1357 = vperm.xlu0 %1356, %v794
    %v1358 = vpop.permute.xlu0 %1357
    %v1359 = vlaneseq
    %v1360 = vshrl.u32 %v1359, 7
    %v1361 = vsub.s32 %v546, %v1360
    %v1362 = vrot.slane %v1358, %v1361
    %v1363 = vsel %vm594, %v1362, 0
    %1365 = vmatprep.subr.mxu0 0.0
    %1366 = vmatpush1.msra.mxu0 %v91
    %1367 = vmatprep.subr.mxu0 0.0
    %1368 = vmatpush1.msra.mxu0 0.0
    %1369 = vmatprep.subr.mxu0 0.0
    %1370 = vmatpush1.msra.mxu0 0.0
    %1371 = vmatprep.subr.mxu0 0.0
    %1372 = vmatpush1.msra.mxu0 0.0
    %1373 = vmatprep.subr.mxu0 0.0
    %1374 = vmatpush1.msra.mxu0 0.0
    %1375 = vmatprep.subr.mxu0 0.0
    %1376 = vmatpush1.msra.mxu0 0.0
    %1377 = vmatprep.subr.mxu0 0.0
    %1378 = vmatpush1.msra.mxu0 0.0
    %1379 = vmatprep.subr.mxu0 0.0
    %1380 = vmatpush1.msra.mxu0 0.0
    %1381 = vmatprep.subr.mxu0 0.0
    %1382 = vmatpush1.msra.mxu0 0.0
    %1383 = vmatprep.subr.mxu0 0.0
    %1384 = vmatpush1.msra.mxu0 0.0
    %1385 = vmatprep.subr.mxu0 0.0
    %1386 = vmatpush1.msra.mxu0 0.0
    %1387 = vmatprep.subr.mxu0 0.0
    %1388 = vmatpush1.msra.mxu0 0.0
    %1389 = vmatprep.subr.mxu0 0.0
    %1390 = vmatpush1.msra.mxu0 0.0
    %1391 = vmatprep.subr.mxu0 0.0
    %1392 = vmatpush1.msra.mxu0 0.0
    %1393 = vmatprep.subr.mxu0 0.0
    %1394 = vmatpush1.msra.mxu0 0.0
    %1395 = vmatprep.subr.mxu0 0.0
    %1396 = vmatpush1.msra.mxu0 0.0
    %1397 = vmatprep.subr.mxu0 0.0
    %1398 = vmatpush1.msra.mxu0 0.0
    %1399 = vmatprep.subr.mxu0 0.0
    %1400 = vmatpush1.msra.mxu0 0.0
    %1401 = vmatprep.subr.mxu0 0.0
    %1402 = vmatpush1.msra.mxu0 0.0
    %1403 = vmatprep.subr.mxu0 0.0
    %1404 = vmatpush1.msra.mxu0 0.0
    %1405 = vmatprep.subr.mxu0 0.0
    %1406 = vmatpush1.msra.mxu0 0.0
    %1407 = vmatprep.subr.mxu0 0.0
    %1408 = vmatpush1.msra.mxu0 0.0
    %1409 = vmatprep.subr.mxu0 0.0
    %1410 = vmatpush1.msra.mxu0 0.0
    %1411 = vmatprep.subr.mxu0 0.0
    %1412 = vmatpush1.msra.mxu0 0.0
    %1413 = vmatprep.subr.mxu0 0.0
    %1414 = vmatpush1.msra.mxu0 0.0
    %1415 = vmatprep.subr.mxu0 0.0
    %1416 = vmatpush1.msra.mxu0 0.0
    %1417 = vmatprep.subr.mxu0 0.0
    %1418 = vmatpush1.msra.mxu0 0.0
    %1419 = vmatprep.subr.mxu0 0.0
    %1420 = vmatpush1.msra.mxu0 0.0
    %1421 = vmatprep.subr.mxu0 0.0
    %1422 = vmatpush1.msra.mxu0 0.0
    %1423 = vmatprep.subr.mxu0 0.0
    %1424 = vmatpush1.msra.mxu0 0.0
    %1425 = vmatprep.subr.mxu0 0.0
    %1426 = vmatpush1.msra.mxu0 0.0
    %1427 = vmatprep.subr.mxu0 0.0
    %1428 = vmatpush1.msra.mxu0 0.0
    %1429 = vmatprep.mubr.f32.mxu0 0.0
    %1430 = vmatmul.mubr.f32.gmra.mrb[0].mxu0 %v1363
    %v1431 = vpop.f32.mrb[0].mxu0
    %v1432 = vadd.f32 0.0, %v1431
    %v1433 = vpop.f32.mrb[0].mxu0
    %1434 = vdwg.mxu0
    %v1443 = vrot.slane %v952, 7
    %v1444 = vsel %vm579, %v1443, %v872
    %v1445 = vrot.slane %v1032, 6
    %v1446 = vsel %vm581, %v1445, %v1444
    %v1447 = vrot.slane %v1112, 5
    %v1448 = vsel %vm583, %v1447, %v1446
    %v1449 = vrot.slane %v1192, 4
    %v1450 = vsel %vm585, %v1449, %v1448
    %v1451 = vrot.slane %v1272, 3
    %v1452 = vsel %vm587, %v1451, %v1450
    %v1453 = vrot.slane %v1352, 2
    %v1454 = vsel %vm589, %v1453, %v1452
    %v1455 = vrot.slane %v1432, 1
    %v1456 = vsel %vm591, %v1455, %v1454
    %1458 = vst.msk [vmem:[#allocation11] sm:$0xff] %vm104, %v1456
    // Predicated region
    $region46: #{tpu_custom_call.1} parent=1 // pred_check
      _
    $region47: #{tpu_custom_call.1} parent=1 // pred_check_branch
      %1460 = sbr.rel (0) target = $region49
    $region48: #{tpu_custom_call.1} parent=1 // pred_region
      %s1462 = ssub.s32 128, 128
      %1463 = vsyncadd [#allocation5], %s1462
      %s1465 = sshll.u32 [#allocation11], 4
      %s1466 = int_to_ptr.vmem [resolvable:$true] %s1465
      %1468 = dma.vmem_to_hbm [thread:$0]  %s1466, 128, %s7, [#allocation5]
    $region49: #{tpu_custom_call.1} parent=1 // pred_fallthru
      _
    // Predicated region
    $region50: #{tpu_custom_call.1} parent=1 // pred_check
      _
    $region51: #{tpu_custom_call.1} parent=1 // pred_check_branch
      %1470 = sbr.rel (0) target = $region53
    $region52: #{tpu_custom_call.1} parent=1 // pred_region
      %1471 = dma.done [#allocation5], 128
    $region53: #{tpu_custom_call.1} parent=1 // pred_fallthru
      _
    %1472 = vsyncpa [#allocation4], 1
    %1473 = vsyncpa [#allocation7], 1
    %1474 = vsyncpa [#allocation10], 1
    %1475 = vsyncpa [#allocation5], 1

</llo_original>
